<compile_context>
chip_gen: v6e
topology: v6e:2x2x1
jax: 0.10.0
libtpu: 0.0.40
codegen_flags: <defaults>
</compile_context>

<pallas_src>
import functools

import jax
import jax.numpy as jnp
from jax.experimental import pallas as pl
from jax.experimental.pallas import tpu as pltpu


def _round_up(x, m):
    return ((x + m - 1) // m) * m


def _critic_kernel(x_ref, w1_ref, b1_ref, w2_ref, b2_ref, w3_ref, b3_ref,
                   w4_ref, b4_ref, o_ref):
    x = x_ref[...]                                     # (TB, Dp)

    # Layer 1: (TB, Dp) @ (Dp, 128) + (1, 128) -> ReLU
    h = jnp.dot(x, w1_ref[...], preferred_element_type=jnp.float32) + b1_ref[...]
    h = jnp.maximum(h, 0.0)

    # Layer 2: (TB, 128) @ (128, 128) + (1, 128) -> ReLU
    h = jnp.dot(h, w2_ref[...], preferred_element_type=jnp.float32) + b2_ref[...]
    h = jnp.maximum(h, 0.0)

    # Layer 3: (TB, 128) @ (128, 64) + (1, 64) -> ReLU
    h = jnp.dot(h, w3_ref[...], preferred_element_type=jnp.float32) + b3_ref[...]
    h = jnp.maximum(h, 0.0)

    # Value head on the MXU: (1, 64) x (TB, 64), contracting features -> (1, TB).
    # Result is lane-dense (batch along lanes) -> unmasked full-width stores.
    v = jax.lax.dot_general(
        w4_ref[...], h,
        dimension_numbers=(((1,), (1,)), ((), ())),
        preferred_element_type=jnp.float32)
    o_ref[...] = (v + b4_ref[...]).astype(o_ref.dtype)


@functools.partial(jax.jit, static_argnames=("tb",))
def critic_forward(x, params, *, tb=256):
    """x: (B, input_dim) float32 -> (B, 1) float32."""
    w1, b1, w2, b2, w3, b3, w4, b4 = params
    B, D = x.shape

    # Batch tile: multiple of 128 (lane-dense output, MXU-friendly M), capped at
    # the rounded-up batch so small batches run as a single grid step.
    tb = _round_up(min(tb, _round_up(B, 128)), 128)
    Bp = _round_up(B, tb)
    # Pad the first contraction dim to a multiple of 128 (full MXU depth,
    # (8,128)-aligned x tile). Zero padding is numerically exact.
    Dp = _round_up(D, 128)

    x_p = jnp.pad(x, ((0, Bp - B), (0, Dp - D)))
    w1_p = jnp.pad(w1, ((0, Dp - D), (0, 0)))

    grid = (Bp // tb,)

    def _rep(shape):
        # full-array block, same block for every grid step (DMA'd once)
        nd = len(shape)
        return pl.BlockSpec(shape, lambda i: (0,) * nd)

    out = pl.pallas_call(
        _critic_kernel,
        out_shape=jax.ShapeDtypeStruct((1, Bp), jnp.float32),
        grid_spec=pltpu.PrefetchScalarGridSpec(
            num_scalar_prefetch=0,
            grid=grid,
            in_specs=[
                pl.BlockSpec((tb, Dp), lambda i: (i, 0)),   # x (batch-tiled)
                _rep(w1_p.shape), _rep(b1.shape),
                _rep(w2.shape), _rep(b2.shape),
                _rep(w3.shape), _rep(b3.shape),
                _rep(w4.shape), _rep(b4.shape),
            ],
            # Lane-dense output: grid step i writes columns [i*tb, (i+1)*tb)
            # of the single (1, Bp) row.
            out_specs=pl.BlockSpec((1, tb), lambda i: (0, i)),
        ),
        compiler_params=pltpu.CompilerParams(
            dimension_semantics=("parallel",),   # megacore-shard the batch axis
        ),
    )(x_p, w1_p, b1, w2, b2, w3, b3, w4, b4)

    return out[0, :B].reshape(B, 1)


def _orthogonal(key, shape, gain):
    """Deterministic orthogonal init (mirrors torch layer_init semantics)."""
    rows, cols = shape
    n = max(rows, cols)
    a = jax.random.normal(key, (n, n), dtype=jnp.float32)
    q, r = jnp.linalg.qr(a)
    q = q * jnp.sign(jnp.diag(r))  # deterministic sign convention
    return (gain * q[:rows, :cols]).astype(jnp.float32)


def init_params(key, input_dim):
    k1, k2, k3, k4 = jax.random.split(key, 4)
    sqrt2 = jnp.sqrt(2.0)
    # stored as (in, out) so the kernel does x @ W
    w1 = _orthogonal(k1, (input_dim, 128), sqrt2)
    b1 = jnp.zeros((1, 128), jnp.float32)
    w2 = _orthogonal(k2, (128, 128), sqrt2)
    b2 = jnp.zeros((1, 128), jnp.float32)
    w3 = _orthogonal(k3, (128, 64), sqrt2)
    b3 = jnp.zeros((1, 64), jnp.float32)
    w4t = _orthogonal(k4, (64, 1), 1.0)      # std=1 for the value head
    w4 = w4t.T                                # kernel uses it as a (1, 64) row
    b4 = jnp.zeros((1, 1), jnp.float32)
    return (w1, b1, w2, b2, w3, b3, w4, b4)


def reference_forward(x, params):
    w1, b1, w2, b2, w3, b3, w4, b4 = params
    h = jnp.maximum(x @ w1 + b1, 0.0)
    h = jnp.maximum(h @ w2 + b2, 0.0)
    h = jnp.maximum(h @ w3 + b3, 0.0)
    return jnp.sum(h * w4, axis=-1, keepdims=True) + b4


if __name__ == "__main__":
    key = jax.random.PRNGKey(0)
    kx, kp = jax.random.split(key)

    batch, input_dim = 16, 32
    x = jax.random.normal(kx, (batch, input_dim), dtype=jnp.float32)
    params = init_params(kp, input_dim)

    out = critic_forward(x, params)
    out = jax.block_until_ready(out)

    ref = reference_forward(x, params)
    assert out.shape == (batch, 1)
    assert jnp.allclose(out, ref, atol=1e-3, rtol=1e-3), "mismatch vs reference"

    print("KERNEL_OK")
</pallas_src>

<mosaic_0001>
module attributes {stable_mosaic.version = 11 : i64} {
  func.func @_critic_kernel(%arg0: i32, %arg1: memref<128x128xf32, #tpu.memory_space<vmem>>, %arg2: memref<128x128xf32, #tpu.memory_space<vmem>>, %arg3: memref<1x128xf32, #tpu.memory_space<vmem>>, %arg4: memref<128x128xf32, #tpu.memory_space<vmem>>, %arg5: memref<1x128xf32, #tpu.memory_space<vmem>>, %arg6: memref<128x64xf32, #tpu.memory_space<vmem>>, %arg7: memref<1x64xf32, #tpu.memory_space<vmem>>, %arg8: memref<1x64xf32, #tpu.memory_space<vmem>>, %arg9: memref<1x1xf32, #tpu.memory_space<vmem>>, %arg10: memref<1x128xf32, #tpu.memory_space<vmem>>) attributes {dimension_semantics = [#tpu.dimension_semantics<parallel>], iteration_bounds = array<i64: 1>, scalar_prefetch = 0 : i64, scratch_operands = 0 : i64, tpu.core_type = #tpu.core_type<tc>, window_params = [{transform_indices = @transform_0, window_bounds = array<i64: 128, 128>}, {pipeline_mode = #tpu.pipeline_mode<synchronous>, transform_indices = @transform_1, window_bounds = array<i64: 128, 128>}, {pipeline_mode = #tpu.pipeline_mode<synchronous>, transform_indices = @transform_2, window_bounds = array<i64: 1, 128>}, {pipeline_mode = #tpu.pipeline_mode<synchronous>, transform_indices = @transform_3, window_bounds = array<i64: 128, 128>}, {pipeline_mode = #tpu.pipeline_mode<synchronous>, transform_indices = @transform_4, window_bounds = array<i64: 1, 128>}, {pipeline_mode = #tpu.pipeline_mode<synchronous>, transform_indices = @transform_5, window_bounds = array<i64: 128, 64>}, {pipeline_mode = #tpu.pipeline_mode<synchronous>, transform_indices = @transform_6, window_bounds = array<i64: 1, 64>}, {pipeline_mode = #tpu.pipeline_mode<synchronous>, transform_indices = @transform_7, window_bounds = array<i64: 1, 64>}, {pipeline_mode = #tpu.pipeline_mode<synchronous>, transform_indices = @transform_8, window_bounds = array<i64: 1, 1>}, {transform_indices = @transform_9, window_bounds = array<i64: 1, 128>}]} {
    %c0 = arith.constant 0 : index
    %c0_0 = arith.constant 0 : index
    %0 = vector.load %arg1[%c0, %c0_0] : memref<128x128xf32, #tpu.memory_space<vmem>>, vector<128x128xf32>
    %c0_1 = arith.constant 0 : index
    %c0_2 = arith.constant 0 : index
    %1 = vector.load %arg2[%c0_1, %c0_2] : memref<128x128xf32, #tpu.memory_space<vmem>>, vector<128x128xf32>
    %cst = arith.constant dense<0.000000e+00> : vector<128x128xf32>
    %2 = tpu.matmul %0, %1, %cst {dimension_numbers = #tpu.dot_dimension_numbers<[1], [0], [0], [1], [0, 0, 1, 1], [], []>} : vector<128x128xf32>, vector<128x128xf32>, vector<128x128xf32> -> vector<128x128xf32>
    %c0_3 = arith.constant 0 : index
    %c0_4 = arith.constant 0 : index
    %3 = vector.load %arg3[%c0_3, %c0_4] : memref<1x128xf32, #tpu.memory_space<vmem>>, vector<1x128xf32>
    %4 = vector.broadcast %3 : vector<1x128xf32> to vector<128x128xf32>
    %5 = arith.addf %2, %4 : vector<128x128xf32>
    %cst_5 = arith.constant 0.000000e+00 : f32
    %6 = vector.broadcast %cst_5 : f32 to vector<128x128xf32>
    %7 = arith.maximumf %5, %6 : vector<128x128xf32>
    %c0_6 = arith.constant 0 : index
    %c0_7 = arith.constant 0 : index
    %8 = vector.load %arg4[%c0_6, %c0_7] : memref<128x128xf32, #tpu.memory_space<vmem>>, vector<128x128xf32>
    %cst_8 = arith.constant dense<0.000000e+00> : vector<128x128xf32>
    %9 = tpu.matmul %7, %8, %cst_8 {dimension_numbers = #tpu.dot_dimension_numbers<[1], [0], [0], [1], [0, 0, 1, 1], [], []>} : vector<128x128xf32>, vector<128x128xf32>, vector<128x128xf32> -> vector<128x128xf32>
    %c0_9 = arith.constant 0 : index
    %c0_10 = arith.constant 0 : index
    %10 = vector.load %arg5[%c0_9, %c0_10] : memref<1x128xf32, #tpu.memory_space<vmem>>, vector<1x128xf32>
    %11 = vector.broadcast %10 : vector<1x128xf32> to vector<128x128xf32>
    %12 = arith.addf %9, %11 : vector<128x128xf32>
    %cst_11 = arith.constant 0.000000e+00 : f32
    %13 = vector.broadcast %cst_11 : f32 to vector<128x128xf32>
    %14 = arith.maximumf %12, %13 : vector<128x128xf32>
    %c0_12 = arith.constant 0 : index
    %c0_13 = arith.constant 0 : index
    %15 = vector.load %arg6[%c0_12, %c0_13] : memref<128x64xf32, #tpu.memory_space<vmem>>, vector<128x64xf32>
    %cst_14 = arith.constant dense<0.000000e+00> : vector<128x64xf32>
    %16 = tpu.matmul %14, %15, %cst_14 {dimension_numbers = #tpu.dot_dimension_numbers<[1], [0], [0], [1], [0, 0, 1, 1], [], []>} : vector<128x128xf32>, vector<128x64xf32>, vector<128x64xf32> -> vector<128x64xf32>
    %c0_15 = arith.constant 0 : index
    %c0_16 = arith.constant 0 : index
    %17 = vector.load %arg7[%c0_15, %c0_16] : memref<1x64xf32, #tpu.memory_space<vmem>>, vector<1x64xf32>
    %18 = vector.broadcast %17 : vector<1x64xf32> to vector<128x64xf32>
    %19 = arith.addf %16, %18 : vector<128x64xf32>
    %cst_17 = arith.constant 0.000000e+00 : f32
    %20 = vector.broadcast %cst_17 : f32 to vector<128x64xf32>
    %21 = arith.maximumf %19, %20 : vector<128x64xf32>
    %c0_18 = arith.constant 0 : index
    %c0_19 = arith.constant 0 : index
    %22 = vector.load %arg8[%c0_18, %c0_19] : memref<1x64xf32, #tpu.memory_space<vmem>>, vector<1x64xf32>
    %cst_20 = arith.constant dense<0.000000e+00> : vector<1x128xf32>
    %23 = tpu.matmul %22, %21, %cst_20 {dimension_numbers = #tpu.dot_dimension_numbers<[1], [1], [0], [0], [0, 0, 1, 0], [], []>} : vector<1x64xf32>, vector<128x64xf32>, vector<1x128xf32> -> vector<1x128xf32>
    %c0_21 = arith.constant 0 : index
    %c0_22 = arith.constant 0 : index
    %24 = vector.load %arg9[%c0_21, %c0_22] : memref<1x1xf32, #tpu.memory_space<vmem>>, vector<1x1xf32>
    %25 = vector.broadcast %24 : vector<1x1xf32> to vector<1x128xf32>
    %26 = arith.addf %23, %25 : vector<1x128xf32>
    %c0_23 = arith.constant 0 : index
    %c0_24 = arith.constant 0 : index
    %27 = vector.load %arg10[%c0_23, %c0_24] : memref<1x128xf32, #tpu.memory_space<vmem>>, vector<1x128xf32>
    tpu.vector_store %arg10[%c0_23, %c0_24], %26 {strides = array<i32>} : memref<1x128xf32, #tpu.memory_space<vmem>>, vector<1x128xf32>,
    return
  }
  func.func @transform_0(%arg0: i32) -> (i32, i32) {
    %c0_i32 = arith.constant 0 : i32
    %c0_i32_0 = arith.constant 0 : i32
    return %arg0, %c0_i32 : i32, i32
  }
  func.func @transform_1(%arg0: i32) -> (i32, i32) {
    %c0_i32 = arith.constant 0 : i32
    %c0_i32_0 = arith.constant 0 : i32
    %c0_i32_1 = arith.constant 0 : i32
    return %c0_i32, %c0_i32_0 : i32, i32
  }
  func.func @transform_2(%arg0: i32) -> (i32, i32) {
    %c0_i32 = arith.constant 0 : i32
    %c0_i32_0 = arith.constant 0 : i32
    %c0_i32_1 = arith.constant 0 : i32
    return %c0_i32, %c0_i32_0 : i32, i32
  }
  func.func @transform_3(%arg0: i32) -> (i32, i32) {
    %c0_i32 = arith.constant 0 : i32
    %c0_i32_0 = arith.constant 0 : i32
    %c0_i32_1 = arith.constant 0 : i32
    return %c0_i32, %c0_i32_0 : i32, i32
  }
  func.func @transform_4(%arg0: i32) -> (i32, i32) {
    %c0_i32 = arith.constant 0 : i32
    %c0_i32_0 = arith.constant 0 : i32
    %c0_i32_1 = arith.constant 0 : i32
    return %c0_i32, %c0_i32_0 : i32, i32
  }
  func.func @transform_5(%arg0: i32) -> (i32, i32) {
    %c0_i32 = arith.constant 0 : i32
    %c0_i32_0 = arith.constant 0 : i32
    %c0_i32_1 = arith.constant 0 : i32
    return %c0_i32, %c0_i32_0 : i32, i32
  }
  func.func @transform_6(%arg0: i32) -> (i32, i32) {
    %c0_i32 = arith.constant 0 : i32
    %c0_i32_0 = arith.constant 0 : i32
    %c0_i32_1 = arith.constant 0 : i32
    return %c0_i32, %c0_i32_0 : i32, i32
  }
  func.func @transform_7(%arg0: i32) -> (i32, i32) {
    %c0_i32 = arith.constant 0 : i32
    %c0_i32_0 = arith.constant 0 : i32
    %c0_i32_1 = arith.constant 0 : i32
    return %c0_i32, %c0_i32_0 : i32, i32
  }
  func.func @transform_8(%arg0: i32) -> (i32, i32) {
    %c0_i32 = arith.constant 0 : i32
    %c0_i32_0 = arith.constant 0 : i32
    %c0_i32_1 = arith.constant 0 : i32
    return %c0_i32, %c0_i32_0 : i32, i32
  }
  func.func @transform_9(%arg0: i32) -> (i32, i32) {
    %c0_i32 = arith.constant 0 : i32
    %c0_i32_0 = arith.constant 0 : i32
    return %c0_i32, %arg0 : i32, i32
  }
}

</mosaic_0001>

<llo_original>
// kernel: critic_forward.1
$region0: #{critic_forward.1}
  #allocation0 [shape = 'u32[]', space=smem, size = 0x4, offset = 0x4, fixed_abs, tag = 'smem constant byte address 0x4 - core index']
  #allocation1 [shape = 'u32[144,128]{1,0:T(1,128)}', space=vmem, size = 0x12000, scoped, tag = 'internal scratch']
  #allocation2 [shape = 'f32[1,1]{1,0:T(1,128)S(1)}', space=vmem, size = 0x200, scoped, tag = 'scoped memory for critic_forward.1']
  %s0 = inlined_call_operand.vmem [shape: f32[128,128], index: 0, kind: input, shape index: {}]
  %s1 = inlined_call_operand.vmem [shape: f32[128,128], index: 1, kind: input, shape index: {}]
  %s2 = inlined_call_operand.vmem [shape: f32[1,128], index: 2, kind: input, shape index: {}]
  %s3 = inlined_call_operand.vmem [shape: f32[128,128], index: 3, kind: input, shape index: {}]
  %s4 = inlined_call_operand.vmem [shape: f32[1,128], index: 4, kind: input, shape index: {}]
  %s5 = inlined_call_operand.vmem [shape: f32[128,64], index: 5, kind: input, shape index: {}]
  %s6 = inlined_call_operand.vmem [shape: f32[1,64], index: 6, kind: input, shape index: {}]
  %s7 = inlined_call_operand.vmem [shape: f32[1,64], index: 7, kind: input, shape index: {}]
  %s8 = inlined_call_operand.<no memory space> [shape: f32[1,1], index: 8, kind: input, shape index: {}]
  %s9 = inlined_call_operand.vmem [shape: f32[1,128], index: 9, kind: output, shape index: {}]
  %s10 = sld [smem:[#allocation0]]
  $region46: #{critic_forward.1} parent=0
    _
  %s12 = ssub.s32 1, %s10
  %s13 = scalar_select 0, %s12, %s10
  %v14 = vstv %s8
  %15 = vst [vmem:[#allocation2] sm:$0x1] %v14
  // Predicated region
  $region2: #{critic_forward.1} parent=0 // pred_check
    _
  $region3: #{critic_forward.1} parent=0 // pred_check_branch
    %17 = sbr.rel (0) target = $region5
  $region4: #{critic_forward.1} parent=0 // pred_region
    _
  $region5: #{critic_forward.1} parent=0 // pred_fallthru
    _
  // Predicated region
  $region6: #{critic_forward.1} parent=0 // pred_check
    _
  $region7: #{critic_forward.1} parent=0 // pred_check_branch
    %19 = sbr.rel (0) target = $region9
  $region8: #{critic_forward.1} parent=0 // pred_region
    _
  $region9: #{critic_forward.1} parent=0 // pred_fallthru
    _
  // Predicated region
  $region10: #{critic_forward.1} parent=0 // pred_check
    _
  $region11: #{critic_forward.1} parent=0 // pred_check_branch
    %21 = sbr.rel (0) target = $region13
  $region12: #{critic_forward.1} parent=0 // pred_region
    _
  $region13: #{critic_forward.1} parent=0 // pred_fallthru
    _
  // Predicated region
  $region14: #{critic_forward.1} parent=0 // pred_check
    _
  $region15: #{critic_forward.1} parent=0 // pred_check_branch
    %23 = sbr.rel (0) target = $region17
  $region16: #{critic_forward.1} parent=0 // pred_region
    _
  $region17: #{critic_forward.1} parent=0 // pred_fallthru
    _
  // Predicated region
  $region18: #{critic_forward.1} parent=0 // pred_check
    _
  $region19: #{critic_forward.1} parent=0 // pred_check_branch
    %25 = sbr.rel (0) target = $region21
  $region20: #{critic_forward.1} parent=0 // pred_region
    _
  $region21: #{critic_forward.1} parent=0 // pred_fallthru
    _
  // Predicated region
  $region22: #{critic_forward.1} parent=0 // pred_check
    _
  $region23: #{critic_forward.1} parent=0 // pred_check_branch
    %27 = sbr.rel (0) target = $region25
  $region24: #{critic_forward.1} parent=0 // pred_region
    _
  $region25: #{critic_forward.1} parent=0 // pred_fallthru
    _
  // Predicated region
  $region26: #{critic_forward.1} parent=0 // pred_check
    _
  $region27: #{critic_forward.1} parent=0 // pred_check_branch
    %29 = sbr.rel (0) target = $region29
  $region28: #{critic_forward.1} parent=0 // pred_region
    _
  $region29: #{critic_forward.1} parent=0 // pred_fallthru
    _
  // Predicated region
  $region30: #{critic_forward.1} parent=0 // pred_check
    _
  $region31: #{critic_forward.1} parent=0 // pred_check_branch
    %31 = sbr.rel (0) target = $region33
  $region32: #{critic_forward.1} parent=0 // pred_region
    _
  $region33: #{critic_forward.1} parent=0 // pred_fallthru
    _
  // Predicated region
  $region34: #{critic_forward.1} parent=0 // pred_check
    _
  $region35: #{critic_forward.1} parent=0 // pred_check_branch
    %33 = sbr.rel (0) target = $region37
  $region36: #{critic_forward.1} parent=0 // pred_region
    _
  $region37: #{critic_forward.1} parent=0 // pred_fallthru
    _
  %v34 = vld [vmem:[%s0] sm:$0xff]
  %v35 = vld [vmem:[%s0 + $0x8] sm:$0xff]
  %v36 = vld [vmem:[%s0 + $0x10] sm:$0xff]
  %v37 = vld [vmem:[%s0 + $0x18] sm:$0xff]
  %v38 = vld [vmem:[%s0 + $0x20] sm:$0xff]
  %v39 = vld [vmem:[%s0 + $0x28] sm:$0xff]
  %v40 = vld [vmem:[%s0 + $0x30] sm:$0xff]
  %v41 = vld [vmem:[%s0 + $0x38] sm:$0xff]
  %v42 = vld [vmem:[%s0 + $0x40] sm:$0xff]
  %v43 = vld [vmem:[%s0 + $0x48] sm:$0xff]
  %v44 = vld [vmem:[%s0 + $0x50] sm:$0xff]
  %v45 = vld [vmem:[%s0 + $0x58] sm:$0xff]
  %v46 = vld [vmem:[%s0 + $0x60] sm:$0xff]
  %v47 = vld [vmem:[%s0 + $0x68] sm:$0xff]
  %v48 = vld [vmem:[%s0 + $0x70] sm:$0xff]
  %v49 = vld [vmem:[%s0 + $0x78] sm:$0xff]
  %v50 = vld [vmem:[%s1] sm:$0xff]
  %v51 = vld [vmem:[%s1 + $0x8] sm:$0xff]
  %v52 = vld [vmem:[%s1 + $0x10] sm:$0xff]
  %v53 = vld [vmem:[%s1 + $0x18] sm:$0xff]
  %v54 = vld [vmem:[%s1 + $0x20] sm:$0xff]
  %v55 = vld [vmem:[%s1 + $0x28] sm:$0xff]
  %v56 = vld [vmem:[%s1 + $0x30] sm:$0xff]
  %v57 = vld [vmem:[%s1 + $0x38] sm:$0xff]
  %v58 = vld [vmem:[%s1 + $0x40] sm:$0xff]
  %v59 = vld [vmem:[%s1 + $0x48] sm:$0xff]
  %v60 = vld [vmem:[%s1 + $0x50] sm:$0xff]
  %v61 = vld [vmem:[%s1 + $0x58] sm:$0xff]
  %v62 = vld [vmem:[%s1 + $0x60] sm:$0xff]
  %v63 = vld [vmem:[%s1 + $0x68] sm:$0xff]
  %v64 = vld [vmem:[%s1 + $0x70] sm:$0xff]
  %v65 = vld [vmem:[%s1 + $0x78] sm:$0xff]
  %v66 = vld [vmem:[%s2] sm:$0x1]
  %v68 = vlaneseq
  %v69 = vshrl.u32 %v68, 7
  %v70 = vsub.s32 0, %v69
  %v71 = vrot.slane %v66, %v70
  %73 = vmatprep.subr.mxu0 0.0
  %74 = vmatpush1.msra.mxu0 %v65
  %75 = vmatprep.subr.mxu0 0.0
  %76 = vmatpush1.msra.mxu0 %v64
  %77 = vmatprep.subr.mxu0 0.0
  %78 = vmatpush1.msra.mxu0 %v63
  %79 = vmatprep.subr.mxu0 0.0
  %80 = vmatpush1.msra.mxu0 %v62
  %81 = vmatprep.subr.mxu0 0.0
  %82 = vmatpush1.msra.mxu0 %v61
  %83 = vmatprep.subr.mxu0 0.0
  %84 = vmatpush1.msra.mxu0 %v60
  %85 = vmatprep.subr.mxu0 0.0
  %86 = vmatpush1.msra.mxu0 %v59
  %87 = vmatprep.subr.mxu0 0.0
  %88 = vmatpush1.msra.mxu0 %v58
  %89 = vmatprep.subr.mxu0 0.0
  %90 = vmatpush1.msra.mxu0 %v57
  %91 = vmatprep.subr.mxu0 0.0
  %92 = vmatpush1.msra.mxu0 %v56
  %93 = vmatprep.subr.mxu0 0.0
  %94 = vmatpush1.msra.mxu0 %v55
  %95 = vmatprep.subr.mxu0 0.0
  %96 = vmatpush1.msra.mxu0 %v54
  %97 = vmatprep.subr.mxu0 0.0
  %98 = vmatpush1.msra.mxu0 %v53
  %99 = vmatprep.subr.mxu0 0.0
  %100 = vmatpush1.msra.mxu0 %v52
  %101 = vmatprep.subr.mxu0 0.0
  %102 = vmatpush1.msra.mxu0 %v51
  %103 = vmatprep.subr.mxu0 0.0
  %104 = vmatpush1.msra.mxu0 %v50
  %105 = vmatprep.subr.mxu0 0.0
  %106 = vmatpush2.msra.mxu0 0.0
  %107 = vmatprep.subr.mxu0 0.0
  %108 = vmatpush2.msra.mxu0 0.0
  %109 = vmatprep.subr.mxu0 0.0
  %110 = vmatpush2.msra.mxu0 0.0
  %111 = vmatprep.subr.mxu0 0.0
  %112 = vmatpush2.msra.mxu0 0.0
  %113 = vmatprep.subr.mxu0 0.0
  %114 = vmatpush2.msra.mxu0 0.0
  %115 = vmatprep.subr.mxu0 0.0
  %116 = vmatpush2.msra.mxu0 0.0
  %117 = vmatprep.subr.mxu0 0.0
  %118 = vmatpush2.msra.mxu0 0.0
  %119 = vmatprep.subr.mxu0 0.0
  %120 = vmatpush2.msra.mxu0 0.0
  %121 = vmatprep.subr.mxu0 0.0
  %122 = vmatpush2.msra.mxu0 0.0
  %123 = vmatprep.subr.mxu0 0.0
  %124 = vmatpush2.msra.mxu0 0.0
  %125 = vmatprep.subr.mxu0 0.0
  %126 = vmatpush2.msra.mxu0 0.0
  %127 = vmatprep.subr.mxu0 0.0
  %128 = vmatpush2.msra.mxu0 0.0
  %129 = vmatprep.subr.mxu0 0.0
  %130 = vmatpush2.msra.mxu0 0.0
  %131 = vmatprep.subr.mxu0 0.0
  %132 = vmatpush2.msra.mxu0 0.0
  %133 = vmatprep.subr.mxu0 0.0
  %134 = vmatpush2.msra.mxu0 0.0
  %135 = vmatprep.subr.mxu0 0.0
  %136 = vmatpush2.msra.mxu0 0.0
  %137 = vmatprep.mubr.f32.mxu0 0.0
  %138 = vmatmul.mubr.f32.gmra.mxu0 %v34
  %v139 = vpop.f32.mrf.mxu0
  %v140 = vadd.f32 %v71, %v139
  %v141 = vpop.f32.mrf.mxu0
  %142 = vmatprep.mubr.f32.mxu0 0.0
  %143 = vmatmul.mubr.f32.gmra.mxu0 %v35
  %v144 = vpop.f32.mrf.mxu0
  %v145 = vadd.f32 %v71, %v144
  %v146 = vpop.f32.mrf.mxu0
  %147 = vmatprep.mubr.f32.mxu0 0.0
  %148 = vmatmul.mubr.f32.gmra.mxu0 %v36
  %v149 = vpop.f32.mrf.mxu0
  %v150 = vadd.f32 %v71, %v149
  %v151 = vpop.f32.mrf.mxu0
  %152 = vmatprep.mubr.f32.mxu0 0.0
  %153 = vmatmul.mubr.f32.gmra.mxu0 %v37
  %v154 = vpop.f32.mrf.mxu0
  %v155 = vadd.f32 %v71, %v154
  %v156 = vpop.f32.mrf.mxu0
  %157 = vmatprep.mubr.f32.mxu0 0.0
  %158 = vmatmul.mubr.f32.gmra.mxu0 %v38
  %v159 = vpop.f32.mrf.mxu0
  %v160 = vadd.f32 %v71, %v159
  %v161 = vpop.f32.mrf.mxu0
  %162 = vmatprep.mubr.f32.mxu0 0.0
  %163 = vmatmul.mubr.f32.gmra.mxu0 %v39
  %v164 = vpop.f32.mrf.mxu0
  %v165 = vadd.f32 %v71, %v164
  %v166 = vpop.f32.mrf.mxu0
  %167 = vmatprep.mubr.f32.mxu0 0.0
  %168 = vmatmul.mubr.f32.gmra.mxu0 %v40
  %v169 = vpop.f32.mrf.mxu0
  %v170 = vadd.f32 %v71, %v169
  %v171 = vpop.f32.mrf.mxu0
  %172 = vmatprep.mubr.f32.mxu0 0.0
  %173 = vmatmul.mubr.f32.gmra.mxu0 %v41
  %v174 = vpop.f32.mrf.mxu0
  %v175 = vadd.f32 %v71, %v174
  %v176 = vpop.f32.mrf.mxu0
  %177 = vmatprep.mubr.f32.mxu0 0.0
  %178 = vmatmul.mubr.f32.gmra.mxu0 %v42
  %v179 = vpop.f32.mrf.mxu0
  %v180 = vadd.f32 %v71, %v179
  %v181 = vpop.f32.mrf.mxu0
  %182 = vmatprep.mubr.f32.mxu0 0.0
  %183 = vmatmul.mubr.f32.gmra.mxu0 %v43
  %v184 = vpop.f32.mrf.mxu0
  %v185 = vadd.f32 %v71, %v184
  %v186 = vpop.f32.mrf.mxu0
  %187 = vmatprep.mubr.f32.mxu0 0.0
  %188 = vmatmul.mubr.f32.gmra.mxu0 %v44
  %v189 = vpop.f32.mrf.mxu0
  %v190 = vadd.f32 %v71, %v189
  %v191 = vpop.f32.mrf.mxu0
  %192 = vmatprep.mubr.f32.mxu0 0.0
  %193 = vmatmul.mubr.f32.gmra.mxu0 %v45
  %v194 = vpop.f32.mrf.mxu0
  %v195 = vadd.f32 %v71, %v194
  %v196 = vpop.f32.mrf.mxu0
  %197 = vmatprep.mubr.f32.mxu0 0.0
  %198 = vmatmul.mubr.f32.gmra.mxu0 %v46
  %v199 = vpop.f32.mrf.mxu0
  %v200 = vadd.f32 %v71, %v199
  %v201 = vpop.f32.mrf.mxu0
  %202 = vmatprep.mubr.f32.mxu0 0.0
  %203 = vmatmul.mubr.f32.gmra.mxu0 %v47
  %v204 = vpop.f32.mrf.mxu0
  %v205 = vadd.f32 %v71, %v204
  %v206 = vpop.f32.mrf.mxu0
  %207 = vmatprep.mubr.f32.mxu0 0.0
  %208 = vmatmul.mubr.f32.gmra.mxu0 %v48
  %v209 = vpop.f32.mrf.mxu0
  %v210 = vadd.f32 %v71, %v209
  %v211 = vpop.f32.mrf.mxu0
  %212 = vmatprep.mubr.f32.mxu0 0.0
  %213 = vmatmul.mubr.f32.gmra.mxu0 %v49
  %v214 = vpop.f32.mrf.mxu0
  %v215 = vadd.f32 %v71, %v214
  %v216 = vpop.f32.mrf.mxu0
  %217 = vdwg.mxu0
  %v218 = vmax.f32 %v140, 0.0
  %v219 = vmax.f32 %v145, 0.0
  %v220 = vmax.f32 %v150, 0.0
  %v221 = vmax.f32 %v155, 0.0
  %v222 = vmax.f32 %v160, 0.0
  %v223 = vmax.f32 %v165, 0.0
  %v224 = vmax.f32 %v170, 0.0
  %v225 = vmax.f32 %v175, 0.0
  %v226 = vmax.f32 %v180, 0.0
  %v227 = vmax.f32 %v185, 0.0
  %v228 = vmax.f32 %v190, 0.0
  %v229 = vmax.f32 %v195, 0.0
  %v230 = vmax.f32 %v200, 0.0
  %v231 = vmax.f32 %v205, 0.0
  %v232 = vmax.f32 %v210, 0.0
  %v233 = vmax.f32 %v215, 0.0
  %v234 = vld [vmem:[%s3] sm:$0xff]
  %v235 = vld [vmem:[%s3 + $0x8] sm:$0xff]
  %v236 = vld [vmem:[%s3 + $0x10] sm:$0xff]
  %v237 = vld [vmem:[%s3 + $0x18] sm:$0xff]
  %v238 = vld [vmem:[%s3 + $0x20] sm:$0xff]
  %v239 = vld [vmem:[%s3 + $0x28] sm:$0xff]
  %v240 = vld [vmem:[%s3 + $0x30] sm:$0xff]
  %v241 = vld [vmem:[%s3 + $0x38] sm:$0xff]
  %v242 = vld [vmem:[%s3 + $0x40] sm:$0xff]
  %v243 = vld [vmem:[%s3 + $0x48] sm:$0xff]
  %v244 = vld [vmem:[%s3 + $0x50] sm:$0xff]
  %v245 = vld [vmem:[%s3 + $0x58] sm:$0xff]
  %v246 = vld [vmem:[%s3 + $0x60] sm:$0xff]
  %v247 = vld [vmem:[%s3 + $0x68] sm:$0xff]
  %v248 = vld [vmem:[%s3 + $0x70] sm:$0xff]
  %v249 = vld [vmem:[%s3 + $0x78] sm:$0xff]
  %v250 = vld [vmem:[%s4] sm:$0x1]
  %v252 = vlaneseq
  %v253 = vshrl.u32 %v252, 7
  %v254 = vsub.s32 0, %v253
  %v255 = vrot.slane %v250, %v254
  %257 = vmatprep.subr.mxu0 0.0
  %258 = vmatpush1.msra.mxu0 %v249
  %259 = vmatprep.subr.mxu0 0.0
  %260 = vmatpush1.msra.mxu0 %v248
  %261 = vmatprep.subr.mxu0 0.0
  %262 = vmatpush1.msra.mxu0 %v247
  %263 = vmatprep.subr.mxu0 0.0
  %264 = vmatpush1.msra.mxu0 %v246
  %265 = vmatprep.subr.mxu0 0.0
  %266 = vmatpush1.msra.mxu0 %v245
  %267 = vmatprep.subr.mxu0 0.0
  %268 = vmatpush1.msra.mxu0 %v244
  %269 = vmatprep.subr.mxu0 0.0
  %270 = vmatpush1.msra.mxu0 %v243
  %271 = vmatprep.subr.mxu0 0.0
  %272 = vmatpush1.msra.mxu0 %v242
  %273 = vmatprep.subr.mxu0 0.0
  %274 = vmatpush1.msra.mxu0 %v241
  %275 = vmatprep.subr.mxu0 0.0
  %276 = vmatpush1.msra.mxu0 %v240
  %277 = vmatprep.subr.mxu0 0.0
  %278 = vmatpush1.msra.mxu0 %v239
  %279 = vmatprep.subr.mxu0 0.0
  %280 = vmatpush1.msra.mxu0 %v238
  %281 = vmatprep.subr.mxu0 0.0
  %282 = vmatpush1.msra.mxu0 %v237
  %283 = vmatprep.subr.mxu0 0.0
  %284 = vmatpush1.msra.mxu0 %v236
  %285 = vmatprep.subr.mxu0 0.0
  %286 = vmatpush1.msra.mxu0 %v235
  %287 = vmatprep.subr.mxu0 0.0
  %288 = vmatpush1.msra.mxu0 %v234
  %289 = vmatprep.subr.mxu0 0.0
  %290 = vmatpush2.msra.mxu0 0.0
  %291 = vmatprep.subr.mxu0 0.0
  %292 = vmatpush2.msra.mxu0 0.0
  %293 = vmatprep.subr.mxu0 0.0
  %294 = vmatpush2.msra.mxu0 0.0
  %295 = vmatprep.subr.mxu0 0.0
  %296 = vmatpush2.msra.mxu0 0.0
  %297 = vmatprep.subr.mxu0 0.0
  %298 = vmatpush2.msra.mxu0 0.0
  %299 = vmatprep.subr.mxu0 0.0
  %300 = vmatpush2.msra.mxu0 0.0
  %301 = vmatprep.subr.mxu0 0.0
  %302 = vmatpush2.msra.mxu0 0.0
  %303 = vmatprep.subr.mxu0 0.0
  %304 = vmatpush2.msra.mxu0 0.0
  %305 = vmatprep.subr.mxu0 0.0
  %306 = vmatpush2.msra.mxu0 0.0
  %307 = vmatprep.subr.mxu0 0.0
  %308 = vmatpush2.msra.mxu0 0.0
  %309 = vmatprep.subr.mxu0 0.0
  %310 = vmatpush2.msra.mxu0 0.0
  %311 = vmatprep.subr.mxu0 0.0
  %312 = vmatpush2.msra.mxu0 0.0
  %313 = vmatprep.subr.mxu0 0.0
  %314 = vmatpush2.msra.mxu0 0.0
  %315 = vmatprep.subr.mxu0 0.0
  %316 = vmatpush2.msra.mxu0 0.0
  %317 = vmatprep.subr.mxu0 0.0
  %318 = vmatpush2.msra.mxu0 0.0
  %319 = vmatprep.subr.mxu0 0.0
  %320 = vmatpush2.msra.mxu0 0.0
  %321 = vmatprep.mubr.f32.mxu0 0.0
  %322 = vmatmul.mubr.f32.gmra.mxu0 %v218
  %v323 = vpop.f32.mrf.mxu0
  %v324 = vadd.f32 %v255, %v323
  %v325 = vpop.f32.mrf.mxu0
  %326 = vmatprep.mubr.f32.mxu0 0.0
  %327 = vmatmul.mubr.f32.gmra.mxu0 %v219
  %v328 = vpop.f32.mrf.mxu0
  %v329 = vadd.f32 %v255, %v328
  %v330 = vpop.f32.mrf.mxu0
  %331 = vmatprep.mubr.f32.mxu0 0.0
  %332 = vmatmul.mubr.f32.gmra.mxu0 %v220
  %v333 = vpop.f32.mrf.mxu0
  %v334 = vadd.f32 %v255, %v333
  %v335 = vpop.f32.mrf.mxu0
  %336 = vmatprep.mubr.f32.mxu0 0.0
  %337 = vmatmul.mubr.f32.gmra.mxu0 %v221
  %v338 = vpop.f32.mrf.mxu0
  %v339 = vadd.f32 %v255, %v338
  %v340 = vpop.f32.mrf.mxu0
  %341 = vmatprep.mubr.f32.mxu0 0.0
  %342 = vmatmul.mubr.f32.gmra.mxu0 %v222
  %v343 = vpop.f32.mrf.mxu0
  %v344 = vadd.f32 %v255, %v343
  %v345 = vpop.f32.mrf.mxu0
  %346 = vmatprep.mubr.f32.mxu0 0.0
  %347 = vmatmul.mubr.f32.gmra.mxu0 %v223
  %v348 = vpop.f32.mrf.mxu0
  %v349 = vadd.f32 %v255, %v348
  %v350 = vpop.f32.mrf.mxu0
  %351 = vmatprep.mubr.f32.mxu0 0.0
  %352 = vmatmul.mubr.f32.gmra.mxu0 %v224
  %v353 = vpop.f32.mrf.mxu0
  %v354 = vadd.f32 %v255, %v353
  %v355 = vpop.f32.mrf.mxu0
  %356 = vmatprep.mubr.f32.mxu0 0.0
  %357 = vmatmul.mubr.f32.gmra.mxu0 %v225
  %v358 = vpop.f32.mrf.mxu0
  %v359 = vadd.f32 %v255, %v358
  %v360 = vpop.f32.mrf.mxu0
  %361 = vmatprep.mubr.f32.mxu0 0.0
  %362 = vmatmul.mubr.f32.gmra.mxu0 %v226
  %v363 = vpop.f32.mrf.mxu0
  %v364 = vadd.f32 %v255, %v363
  %v365 = vpop.f32.mrf.mxu0
  %366 = vmatprep.mubr.f32.mxu0 0.0
  %367 = vmatmul.mubr.f32.gmra.mxu0 %v227
  %v368 = vpop.f32.mrf.mxu0
  %v369 = vadd.f32 %v255, %v368
  %v370 = vpop.f32.mrf.mxu0
  %371 = vmatprep.mubr.f32.mxu0 0.0
  %372 = vmatmul.mubr.f32.gmra.mxu0 %v228
  %v373 = vpop.f32.mrf.mxu0
  %v374 = vadd.f32 %v255, %v373
  %v375 = vpop.f32.mrf.mxu0
  %376 = vmatprep.mubr.f32.mxu0 0.0
  %377 = vmatmul.mubr.f32.gmra.mxu0 %v229
  %v378 = vpop.f32.mrf.mxu0
  %v379 = vadd.f32 %v255, %v378
  %v380 = vpop.f32.mrf.mxu0
  %381 = vmatprep.mubr.f32.mxu0 0.0
  %382 = vmatmul.mubr.f32.gmra.mxu0 %v230
  %v383 = vpop.f32.mrf.mxu0
  %v384 = vadd.f32 %v255, %v383
  %v385 = vpop.f32.mrf.mxu0
  %386 = vmatprep.mubr.f32.mxu0 0.0
  %387 = vmatmul.mubr.f32.gmra.mxu0 %v231
  %v388 = vpop.f32.mrf.mxu0
  %v389 = vadd.f32 %v255, %v388
  %v390 = vpop.f32.mrf.mxu0
  %391 = vmatprep.mubr.f32.mxu0 0.0
  %392 = vmatmul.mubr.f32.gmra.mxu0 %v232
  %v393 = vpop.f32.mrf.mxu0
  %v394 = vadd.f32 %v255, %v393
  %v395 = vpop.f32.mrf.mxu0
  %396 = vmatprep.mubr.f32.mxu0 0.0
  %397 = vmatmul.mubr.f32.gmra.mxu0 %v233
  %v398 = vpop.f32.mrf.mxu0
  %v399 = vadd.f32 %v255, %v398
  %v400 = vpop.f32.mrf.mxu0
  %401 = vdwg.mxu0
  %v402 = vmax.f32 %v324, 0.0
  %v403 = vmax.f32 %v329, 0.0
  %v404 = vmax.f32 %v334, 0.0
  %v405 = vmax.f32 %v339, 0.0
  %v406 = vmax.f32 %v344, 0.0
  %v407 = vmax.f32 %v349, 0.0
  %v408 = vmax.f32 %v354, 0.0
  %v409 = vmax.f32 %v359, 0.0
  %v410 = vmax.f32 %v364, 0.0
  %v411 = vmax.f32 %v369, 0.0
  %v412 = vmax.f32 %v374, 0.0
  %v413 = vmax.f32 %v379, 0.0
  %v414 = vmax.f32 %v384, 0.0
  %v415 = vmax.f32 %v389, 0.0
  %v416 = vmax.f32 %v394, 0.0
  %v417 = vmax.f32 %v399, 0.0
  %v418 = vld [vmem:[%s5] sm:$0xff]
  %v419 = vld [vmem:[%s5 + $0x8] sm:$0xff]
  %v420 = vld [vmem:[%s5 + $0x10] sm:$0xff]
  %v421 = vld [vmem:[%s5 + $0x18] sm:$0xff]
  %v422 = vld [vmem:[%s5 + $0x20] sm:$0xff]
  %v423 = vld [vmem:[%s5 + $0x28] sm:$0xff]
  %v424 = vld [vmem:[%s5 + $0x30] sm:$0xff]
  %v425 = vld [vmem:[%s5 + $0x38] sm:$0xff]
  %v426 = vld [vmem:[%s5 + $0x40] sm:$0xff]
  %v427 = vld [vmem:[%s5 + $0x48] sm:$0xff]
  %v428 = vld [vmem:[%s5 + $0x50] sm:$0xff]
  %v429 = vld [vmem:[%s5 + $0x58] sm:$0xff]
  %v430 = vld [vmem:[%s5 + $0x60] sm:$0xff]
  %v431 = vld [vmem:[%s5 + $0x68] sm:$0xff]
  %v432 = vld [vmem:[%s5 + $0x70] sm:$0xff]
  %v433 = vld [vmem:[%s5 + $0x78] sm:$0xff]
  %v434 = vld [vmem:[%s6] sm:$0x1]
  %v436 = vlaneseq
  %v437 = vshrl.u32 %v436, 7
  %v438 = vsub.s32 0, %v437
  %v439 = vrot.slane %v434, %v438
  %441 = vmatprep.subr.mxu0 0.0
  %442 = vmatpush1.msra.mxu0 %v433
  %443 = vmatprep.subr.mxu0 0.0
  %444 = vmatpush1.msra.mxu0 %v432
  %445 = vmatprep.subr.mxu0 0.0
  %446 = vmatpush1.msra.mxu0 %v431
  %447 = vmatprep.subr.mxu0 0.0
  %448 = vmatpush1.msra.mxu0 %v430
  %449 = vmatprep.subr.mxu0 0.0
  %450 = vmatpush1.msra.mxu0 %v429
  %451 = vmatprep.subr.mxu0 0.0
  %452 = vmatpush1.msra.mxu0 %v428
  %453 = vmatprep.subr.mxu0 0.0
  %454 = vmatpush1.msra.mxu0 %v427
  %455 = vmatprep.subr.mxu0 0.0
  %456 = vmatpush1.msra.mxu0 %v426
  %457 = vmatprep.subr.mxu0 0.0
  %458 = vmatpush1.msra.mxu0 %v425
  %459 = vmatprep.subr.mxu0 0.0
  %460 = vmatpush1.msra.mxu0 %v424
  %461 = vmatprep.subr.mxu0 0.0
  %462 = vmatpush1.msra.mxu0 %v423
  %463 = vmatprep.subr.mxu0 0.0
  %464 = vmatpush1.msra.mxu0 %v422
  %465 = vmatprep.subr.mxu0 0.0
  %466 = vmatpush1.msra.mxu0 %v421
  %467 = vmatprep.subr.mxu0 0.0
  %468 = vmatpush1.msra.mxu0 %v420
  %469 = vmatprep.subr.mxu0 0.0
  %470 = vmatpush1.msra.mxu0 %v419
  %471 = vmatprep.subr.mxu0 0.0
  %472 = vmatpush1.msra.mxu0 %v418
  %473 = vmatprep.subr.mxu0 0.0
  %474 = vmatpush2.msra.mxu0 0.0
  %475 = vmatprep.subr.mxu0 0.0
  %476 = vmatpush2.msra.mxu0 0.0
  %477 = vmatprep.subr.mxu0 0.0
  %478 = vmatpush2.msra.mxu0 0.0
  %479 = vmatprep.subr.mxu0 0.0
  %480 = vmatpush2.msra.mxu0 0.0
  %481 = vmatprep.subr.mxu0 0.0
  %482 = vmatpush2.msra.mxu0 0.0
  %483 = vmatprep.subr.mxu0 0.0
  %484 = vmatpush2.msra.mxu0 0.0
  %485 = vmatprep.subr.mxu0 0.0
  %486 = vmatpush2.msra.mxu0 0.0
  %487 = vmatprep.subr.mxu0 0.0
  %488 = vmatpush2.msra.mxu0 0.0
  %489 = vmatprep.subr.mxu0 0.0
  %490 = vmatpush2.msra.mxu0 0.0
  %491 = vmatprep.subr.mxu0 0.0
  %492 = vmatpush2.msra.mxu0 0.0
  %493 = vmatprep.subr.mxu0 0.0
  %494 = vmatpush2.msra.mxu0 0.0
  %495 = vmatprep.subr.mxu0 0.0
  %496 = vmatpush2.msra.mxu0 0.0
  %497 = vmatprep.subr.mxu0 0.0
  %498 = vmatpush2.msra.mxu0 0.0
  %499 = vmatprep.subr.mxu0 0.0
  %500 = vmatpush2.msra.mxu0 0.0
  %501 = vmatprep.subr.mxu0 0.0
  %502 = vmatpush2.msra.mxu0 0.0
  %503 = vmatprep.subr.mxu0 0.0
  %504 = vmatpush2.msra.mxu0 0.0
  %505 = vmatprep.mubr.f32.mxu0 0.0
  %506 = vmatmul.mubr.f32.gmra.mxu0 %v402
  %v507 = vpop.f32.mrf.mxu0
  %v508 = vadd.f32 %v439, %v507
  %v509 = vpop.f32.mrf.mxu0
  %510 = vmatprep.mubr.f32.mxu0 0.0
  %511 = vmatmul.mubr.f32.gmra.mxu0 %v403
  %v512 = vpop.f32.mrf.mxu0
  %v513 = vadd.f32 %v439, %v512
  %v514 = vpop.f32.mrf.mxu0
  %515 = vmatprep.mubr.f32.mxu0 0.0
  %516 = vmatmul.mubr.f32.gmra.mxu0 %v404
  %v517 = vpop.f32.mrf.mxu0
  %v518 = vadd.f32 %v439, %v517
  %v519 = vpop.f32.mrf.mxu0
  %520 = vmatprep.mubr.f32.mxu0 0.0
  %521 = vmatmul.mubr.f32.gmra.mxu0 %v405
  %v522 = vpop.f32.mrf.mxu0
  %v523 = vadd.f32 %v439, %v522
  %v524 = vpop.f32.mrf.mxu0
  %525 = vmatprep.mubr.f32.mxu0 0.0
  %526 = vmatmul.mubr.f32.gmra.mxu0 %v406
  %v527 = vpop.f32.mrf.mxu0
  %v528 = vadd.f32 %v439, %v527
  %v529 = vpop.f32.mrf.mxu0
  %530 = vmatprep.mubr.f32.mxu0 0.0
  %531 = vmatmul.mubr.f32.gmra.mxu0 %v407
  %v532 = vpop.f32.mrf.mxu0
  %v533 = vadd.f32 %v439, %v532
  %v534 = vpop.f32.mrf.mxu0
  %535 = vmatprep.mubr.f32.mxu0 0.0
  %536 = vmatmul.mubr.f32.gmra.mxu0 %v408
  %v537 = vpop.f32.mrf.mxu0
  %v538 = vadd.f32 %v439, %v537
  %v539 = vpop.f32.mrf.mxu0
  %540 = vmatprep.mubr.f32.mxu0 0.0
  %541 = vmatmul.mubr.f32.gmra.mxu0 %v409
  %v542 = vpop.f32.mrf.mxu0
  %v543 = vadd.f32 %v439, %v542
  %v544 = vpop.f32.mrf.mxu0
  %545 = vmatprep.mubr.f32.mxu0 0.0
  %546 = vmatmul.mubr.f32.gmra.mxu0 %v410
  %v547 = vpop.f32.mrf.mxu0
  %v548 = vadd.f32 %v439, %v547
  %v549 = vpop.f32.mrf.mxu0
  %550 = vmatprep.mubr.f32.mxu0 0.0
  %551 = vmatmul.mubr.f32.gmra.mxu0 %v411
  %v552 = vpop.f32.mrf.mxu0
  %v553 = vadd.f32 %v439, %v552
  %v554 = vpop.f32.mrf.mxu0
  %555 = vmatprep.mubr.f32.mxu0 0.0
  %556 = vmatmul.mubr.f32.gmra.mxu0 %v412
  %v557 = vpop.f32.mrf.mxu0
  %v558 = vadd.f32 %v439, %v557
  %v559 = vpop.f32.mrf.mxu0
  %560 = vmatprep.mubr.f32.mxu0 0.0
  %561 = vmatmul.mubr.f32.gmra.mxu0 %v413
  %v562 = vpop.f32.mrf.mxu0
  %v563 = vadd.f32 %v439, %v562
  %v564 = vpop.f32.mrf.mxu0
  %565 = vmatprep.mubr.f32.mxu0 0.0
  %566 = vmatmul.mubr.f32.gmra.mxu0 %v414
  %v567 = vpop.f32.mrf.mxu0
  %v568 = vadd.f32 %v439, %v567
  %v569 = vpop.f32.mrf.mxu0
  %570 = vmatprep.mubr.f32.mxu0 0.0
  %571 = vmatmul.mubr.f32.gmra.mxu0 %v415
  %v572 = vpop.f32.mrf.mxu0
  %v573 = vadd.f32 %v439, %v572
  %v574 = vpop.f32.mrf.mxu0
  %575 = vmatprep.mubr.f32.mxu0 0.0
  %576 = vmatmul.mubr.f32.gmra.mxu0 %v416
  %v577 = vpop.f32.mrf.mxu0
  %v578 = vadd.f32 %v439, %v577
  %v579 = vpop.f32.mrf.mxu0
  %580 = vmatprep.mubr.f32.mxu0 0.0
  %581 = vmatmul.mubr.f32.gmra.mxu0 %v417
  %v582 = vpop.f32.mrf.mxu0
  %v583 = vadd.f32 %v439, %v582
  %v584 = vpop.f32.mrf.mxu0
  %585 = vdwg.mxu0
  %v586 = vmax.f32 %v508, 0.0
  %v587 = vmax.f32 %v513, 0.0
  %v588 = vmax.f32 %v518, 0.0
  %v589 = vmax.f32 %v523, 0.0
  %v590 = vmax.f32 %v528, 0.0
  %v591 = vmax.f32 %v533, 0.0
  %v592 = vmax.f32 %v538, 0.0
  %v593 = vmax.f32 %v543, 0.0
  %v594 = vmax.f32 %v548, 0.0
  %v595 = vmax.f32 %v553, 0.0
  %v596 = vmax.f32 %v558, 0.0
  %v597 = vmax.f32 %v563, 0.0
  %v598 = vmax.f32 %v568, 0.0
  %v599 = vmax.f32 %v573, 0.0
  %v600 = vmax.f32 %v578, 0.0
  %v601 = vmax.f32 %v583, 0.0
  %v602 = vld [vmem:[%s7] sm:$0x1]
  %v603 = vld [vmem:[#allocation2] sm:$0x1]
  %605 = vset.pattern.permute.xlu0 0
  %606 = vperm.xlu0 %605, %v603
  %v607 = vpop.permute.xlu0 %606
  %v609 = vlaneseq
  %v610 = vshrl.u32 %v609, 7
  %v611 = vsub.s32 0, %v610
  %v612 = vrot.slane %v607, %v611
  %vm613 = vcmask 523264
  %v615 = vsel %vm613, %v602, 0
  %v618 = vsel %vm613, %v586, 0
  %v621 = vsel %vm613, %v587, 0
  %v624 = vsel %vm613, %v588, 0
  %v627 = vsel %vm613, %v589, 0
  %v630 = vsel %vm613, %v590, 0
  %v633 = vsel %vm613, %v591, 0
  %v636 = vsel %vm613, %v592, 0
  %v639 = vsel %vm613, %v593, 0
  %v642 = vsel %vm613, %v594, 0
  %v645 = vsel %vm613, %v595, 0
  %v648 = vsel %vm613, %v596, 0
  %v651 = vsel %vm613, %v597, 0
  %v654 = vsel %vm613, %v598, 0
  %v657 = vsel %vm613, %v599, 0
  %v660 = vsel %vm613, %v600, 0
  %v663 = vsel %vm613, %v601, 0
  %665 = vmatprep.subr.mxu0 0.0
  %666 = vmatpush1.xpose.msra.mxu0 %v663
  %667 = vmatprep.subr.mxu0 0.0
  %668 = vmatpush1.xpose.msra.mxu0 %v660
  %669 = vmatprep.subr.mxu0 0.0
  %670 = vmatpush1.xpose.msra.mxu0 %v657
  %671 = vmatprep.subr.mxu0 0.0
  %672 = vmatpush1.xpose.msra.mxu0 %v654
  %673 = vmatprep.subr.mxu0 0.0
  %674 = vmatpush1.xpose.msra.mxu0 %v651
  %675 = vmatprep.subr.mxu0 0.0
  %676 = vmatpush1.xpose.msra.mxu0 %v648
  %677 = vmatprep.subr.mxu0 0.0
  %678 = vmatpush1.xpose.msra.mxu0 %v645
  %679 = vmatprep.subr.mxu0 0.0
  %680 = vmatpush1.xpose.msra.mxu0 %v642
  %681 = vmatprep.subr.mxu0 0.0
  %682 = vmatpush1.xpose.msra.mxu0 %v639
  %683 = vmatprep.subr.mxu0 0.0
  %684 = vmatpush1.xpose.msra.mxu0 %v636
  %685 = vmatprep.subr.mxu0 0.0
  %686 = vmatpush1.xpose.msra.mxu0 %v633
  %687 = vmatprep.subr.mxu0 0.0
  %688 = vmatpush1.xpose.msra.mxu0 %v630
  %689 = vmatprep.subr.mxu0 0.0
  %690 = vmatpush1.xpose.msra.mxu0 %v627
  %691 = vmatprep.subr.mxu0 0.0
  %692 = vmatpush1.xpose.msra.mxu0 %v624
  %693 = vmatprep.subr.mxu0 0.0
  %694 = vmatpush1.xpose.msra.mxu0 %v621
  %695 = vmatprep.subr.mxu0 0.0
  %696 = vmatpush1.xpose.msra.mxu0 %v618
  %697 = vmatprep.subr.mxu0 0.0
  %698 = vmatpush2.xpose.msra.mxu0 0.0
  %699 = vmatprep.subr.mxu0 0.0
  %700 = vmatpush2.xpose.msra.mxu0 0.0
  %701 = vmatprep.subr.mxu0 0.0
  %702 = vmatpush2.xpose.msra.mxu0 0.0
  %703 = vmatprep.subr.mxu0 0.0
  %704 = vmatpush2.xpose.msra.mxu0 0.0
  %705 = vmatprep.subr.mxu0 0.0
  %706 = vmatpush2.xpose.msra.mxu0 0.0
  %707 = vmatprep.subr.mxu0 0.0
  %708 = vmatpush2.xpose.msra.mxu0 0.0
  %709 = vmatprep.subr.mxu0 0.0
  %710 = vmatpush2.xpose.msra.mxu0 0.0
  %711 = vmatprep.subr.mxu0 0.0
  %712 = vmatpush2.xpose.msra.mxu0 0.0
  %713 = vmatprep.subr.mxu0 0.0
  %714 = vmatpush2.xpose.msra.mxu0 0.0
  %715 = vmatprep.subr.mxu0 0.0
  %716 = vmatpush2.xpose.msra.mxu0 0.0
  %717 = vmatprep.subr.mxu0 0.0
  %718 = vmatpush2.xpose.msra.mxu0 0.0
  %719 = vmatprep.subr.mxu0 0.0
  %720 = vmatpush2.xpose.msra.mxu0 0.0
  %721 = vmatprep.subr.mxu0 0.0
  %722 = vmatpush2.xpose.msra.mxu0 0.0
  %723 = vmatprep.subr.mxu0 0.0
  %724 = vmatpush2.xpose.msra.mxu0 0.0
  %725 = vmatprep.subr.mxu0 0.0
  %726 = vmatpush2.xpose.msra.mxu0 0.0
  %727 = vmatprep.subr.mxu0 0.0
  %728 = vmatpush2.xpose.msra.mxu0 0.0
  %729 = vmatprep.mubr.f32.mxu0 0.0
  %730 = vmatmul.mubr.f32.gmra.mxu0 %v615
  %v731 = vpop.f32.mrf.mxu0
  %v732 = vadd.f32 %v612, %v731
  %v733 = vpop.f32.mrf.mxu0
  %734 = vdwg.mxu0
  %735 = vst [vmem:[%s9] sm:$0x1] %v732
  // Predicated region
  $region38: #{critic_forward.1} parent=0 // pred_check
    _
  $region39: #{critic_forward.1} parent=0 // pred_check_branch
    %737 = sbr.rel (0) target = $region41
  $region40: #{critic_forward.1} parent=0 // pred_region
    _
  $region41: #{critic_forward.1} parent=0 // pred_fallthru
    _
  // Predicated region
  $region42: #{critic_forward.1} parent=0 // pred_check
    _
  $region43: #{critic_forward.1} parent=0 // pred_check_branch
    %739 = sbr.rel (0) target = $region45
  $region44: #{critic_forward.1} parent=0 // pred_region
    _
  $region45: #{critic_forward.1} parent=0 // pred_fallthru
    _

</llo_original>
